<compile_context>
chip_gen: v7x
topology: tpu7x:2x2x1
jax: 0.10.0
libtpu: 0.0.40
codegen_flags: <defaults>
</compile_context>

<pallas_src>
import numpy as np
import jax
import jax.numpy as jnp
from jax.experimental import pallas as pl
from jax.experimental.pallas import tpu as pltpu


# ----------------------------- weight construction (host) -----------------------------

_A_CUBIC = -0.75  # PyTorch's bicubic "a" coefficient


def _cubic_conv1(x, a=_A_CUBIC):
    # |x| <= 1
    return ((a + 2.0) * x - (a + 3.0)) * x * x + 1.0


def _cubic_conv2(x, a=_A_CUBIC):
    # 1 < |x| < 2
    return ((a * x - 5.0 * a) * x + 8.0 * a) * x - 4.0 * a


def _build_resize_matrix(out_size, in_size):
    """M (out_size, in_size): PyTorch bicubic, align_corners=False, clamped taps."""
    scale = in_size / out_size
    m = np.zeros((out_size, in_size), dtype=np.float64)
    for i in range(out_size):
        src = scale * (i + 0.5) - 0.5
        i0 = int(np.floor(src))
        t = src - i0
        wts = (
            _cubic_conv2(t + 1.0),
            _cubic_conv1(t),
            _cubic_conv1(1.0 - t),
            _cubic_conv2(2.0 - t),
        )
        for k in range(4):
            idx = min(max(i0 - 1 + k, 0), in_size - 1)
            m[i, idx] += wts[k]
    return m


def _build_replicate_pad_matrix(in_size, pad_before, pad_after):
    """G (in_size + pads, in_size): replicate ('edge') padding as a gather matrix."""
    padded = in_size + pad_before + pad_after
    g = np.zeros((padded, in_size), dtype=np.float64)
    for p in range(padded):
        g[p, min(max(p - pad_before, 0), in_size - 1)] = 1.0
    return g


def _fold_pad_resize_matrices(h, w, pads):
    """Fold replicate-pad + bicubic-resize into (H,H) row and (W,W) col matrices."""
    pad_l, pad_r, pad_t, pad_b = pads
    hp = h + pad_t + pad_b
    wp = w + pad_l + pad_r
    a = _build_resize_matrix(h, hp) @ _build_replicate_pad_matrix(h, pad_t, pad_b)
    b = _build_resize_matrix(w, wp) @ _build_replicate_pad_matrix(w, pad_l, pad_r)
    return a, b  # float64, (h,h) and (w,w)


# ----------------------------- small helpers -----------------------------

def _round_up(v, m):
    return (v + m - 1) // m * m


def _vmem_capacity_bytes():
    try:
        return int(pltpu.get_tpu_info().vmem_capacity_bytes)
    except Exception:
        return 64 << 20  # conservative (v7x-sized) fallback


def _vmem_limit_bytes():
    # 3/4 of physical VMEM, capped at 96 MiB (always <= physical on v5e/v6e/v7x).
    return int(min(_vmem_capacity_bytes() * 3 // 4, 96 << 20))


def _kron_hw_limit():
    # Above this h*w, the kron path's ~h/2x extra MXU FLOPs cross the per-chip
    # compute ridge and the separable row/col path wins (v5e/v7x ~1024; v6e 2048).
    try:
        kind = jax.devices()[0].device_kind.lower()
    except Exception:
        kind = ""
    return 2048 if "v6" in kind else 1024


def _single_buffered_spec(block_shape, index_map):
    """Single-buffer a block whose index never changes (saves one K-sized VMEM
    buffer); silently falls back if pipeline_mode is unavailable."""
    if hasattr(pl, "Buffered"):
        try:
            return pl.BlockSpec(block_shape, index_map, pipeline_mode=pl.Buffered(1))
        except TypeError:
            pass
    return pl.BlockSpec(block_shape, index_map)


# ----------------------------- Pallas kernels -----------------------------

def _kron_kernel(x_ref, k_ref, o_ref):
    # x_ref: (tm, HW); k_ref: (HW, tn) bf16; o_ref: (tm, tn).
    # bf16 MXU operands, f32 accumulation.
    # TODO(synk): use a bf16x3-split K if tighter parity with f32 bicubic is needed.
    x = x_ref[...].astype(jnp.bfloat16)
    acc = jnp.dot(x, k_ref[...], preferred_element_type=jnp.float32)
    o_ref[...] = acc.astype(o_ref.dtype)


def _rowcol_kernel(bt_ref, at_ref, x_ref, o_ref):
    # Separable fallback. bt_ref: (W, W) bf16 = B^T; at_ref: (H, H) bf16 = A^T.
    # x_ref / o_ref: (tb, H, W) — a tile of N*C images.
    tb, h, w = x_ref.shape
    x = x_ref[...].astype(jnp.bfloat16)
    # Column pass: images*rows folded into the MXU M dim: (tb*H, W) @ (W, W).
    y = jnp.dot(x.reshape(tb * h, w), bt_ref[...], preferred_element_type=jnp.float32)
    y = y.reshape(tb, h, w).astype(jnp.bfloat16)
    # Row pass as a right-matmul on transposed tiles: (tb*W, H) @ (H, H).
    yt = jnp.swapaxes(y, 1, 2).reshape(tb * w, h)
    z = jnp.dot(yt, at_ref[...], preferred_element_type=jnp.float32)
    o_ref[...] = jnp.swapaxes(z.reshape(tb, w, h), 1, 2).astype(o_ref.dtype)


# ----------------------------- wrappers -----------------------------

def _kron_path(x, a_mat, b_mat):
    n, c, h, w = x.shape
    hw = h * w
    m = n * c
    itemsize = jnp.dtype(x.dtype).itemsize

    # Lane-dense output: pad K's output columns to the next multiple of 128
    # (unmasked full-lane stores); padded columns are sliced off afterwards.
    hw_pad = _round_up(hw, 128)
    k_np = np.kron(a_mat, b_mat).T  # (hw, hw) float64
    if hw_pad != hw:
        k_np = np.concatenate(
            [k_np, np.zeros((hw, hw_pad - hw), dtype=k_np.dtype)], axis=1)
    k = jnp.asarray(k_np, dtype=jnp.bfloat16)
    k_bytes = hw * hw_pad * 2

    x_flat = x.reshape(m, hw)

    # Tile height from a per-generation VMEM budget (v7x: 64 MiB, v5e/v6e: 128 MiB).
    vmem_limit = _vmem_limit_bytes()
    budget = vmem_limit * 3 // 5
    row_bytes = 2 * hw * itemsize + 2 * hw_pad * itemsize  # dbl-buffered in + out
    tm = (budget - 2 * k_bytes) // row_bytes
    tm = max(8, min(1024, (tm // 8) * 8))
    tm = min(tm, _round_up(m, 8))
    grid_m = pl.cdiv(m, tm)  # partial tail block handled by Pallas masked stores

    # K's block index stays constant whenever grid_m > 1 (single DMA, VMEM-resident,
    # full MXU width); only a single-M-block launch gets a 2-way 256-aligned column
    # split so v7x's second TensorCore has work.
    if grid_m == 1 and hw_pad % 512 == 0:
        tn, grid_n = hw_pad // 2, 2
    else:
        tn, grid_n = hw_pad, 1

    if grid_n == 1 and k_bytes >= (1 << 20):
        k_spec = _single_buffered_spec((hw, tn), lambda i, j: (0, 0))
    else:
        k_spec = pl.BlockSpec((hw, tn), lambda i, j: (0, j))

    cost = pl.CostEstimate(
        flops=2 * m * hw * hw_pad,
        transcendentals=0,
        bytes_accessed=(m * hw * itemsize          # read x
                        + m * hw_pad * itemsize    # write out
                        + grid_n * k_bytes),       # read K (once per column tile)
    )

    out_flat = pl.pallas_call(
        _kron_kernel,
        out_shape=jax.ShapeDtypeStruct((m, hw_pad), x.dtype),
        grid_spec=pltpu.PrefetchScalarGridSpec(
            num_scalar_prefetch=0,
            grid=(grid_m, grid_n),
            in_specs=[
                pl.BlockSpec((tm, hw), lambda i, j: (i, 0)),
                k_spec,
            ],
            out_specs=pl.BlockSpec((tm, tn), lambda i, j: (i, j)),
        ),
        compiler_params=pltpu.CompilerParams(
            dimension_semantics=("parallel", "parallel"),
            vmem_limit_bytes=vmem_limit,
        ),
        cost_estimate=cost,
    )(x_flat, k)

    if hw_pad != hw:
        out_flat = out_flat[:, :hw]
    return out_flat.reshape(n, c, h, w)


def _rowcol_path(x, a_mat, b_mat):
    # Separable fallback for spatial sizes where kron(A,B) would be too big /
    # the kron path would be MXU-bound. Not exercised by the __main__ test.
    n, c, h, w = x.shape
    m = n * c
    itemsize = jnp.dtype(x.dtype).itemsize
    xi = x.reshape(m, h, w)
    bt = jnp.asarray(b_mat.T, dtype=jnp.bfloat16)  # (W, W)
    at = jnp.asarray(a_mat.T, dtype=jnp.bfloat16)  # (H, H)

    vmem_limit = _vmem_limit_bytes()
    budget = vmem_limit // 2
    per_img = h * w * (4 * itemsize + 14)  # dbl-buffered in/out + f32/bf16 temps
    tb = max(1, min(m, 256, budget // per_img))
    grid = (pl.cdiv(m, tb),)

    out = pl.pallas_call(
        _rowcol_kernel,
        out_shape=jax.ShapeDtypeStruct((m, h, w), x.dtype),
        grid_spec=pltpu.PrefetchScalarGridSpec(
            num_scalar_prefetch=0,
            grid=grid,
            in_specs=[
                pl.BlockSpec((w, w), lambda i: (0, 0)),
                pl.BlockSpec((h, h), lambda i: (0, 0)),
                pl.BlockSpec((tb, h, w), lambda i: (i, 0, 0)),
            ],
            out_specs=pl.BlockSpec((tb, h, w), lambda i: (i, 0, 0)),
        ),
        compiler_params=pltpu.CompilerParams(
            dimension_semantics=("parallel",),
            vmem_limit_bytes=vmem_limit,
        ),
    )(bt, at, xi)
    return out.reshape(n, c, h, w)


def random_pad_resize(x, seed=0):
    """Pallas implementation of the PyTorch random_pad_resize.forward."""
    n, c, h, w = x.shape
    assert h == w  # matches the PyTorch module's assert

    # TODO(synk): the PyTorch module redraws np.random.randint(0, 8, size=4) per
    # forward; pads are drawn once at trace time here so kernel shapes stay static.
    rs = np.random.RandomState(seed)
    pads = tuple(int(v) for v in rs.randint(0, 8, size=4))  # (left, right, top, bottom)
    a_mat, b_mat = _fold_pad_resize_matrices(h, w, pads)

    if h * w <= _kron_hw_limit():
        return _kron_path(x, a_mat, b_mat)
    return _rowcol_path(x, a_mat, b_mat)


# ----------------------------- reference (host float64) -----------------------------

def _reference_f64(x, a_mat, b_mat):
    xf = np.asarray(x, dtype=np.float64)
    return np.einsum("ih,nchw,jw->ncij", a_mat, xf, b_mat)


if __name__ == "__main__":
    key = jax.random.PRNGKey(0)
    N, C, H, W = 2, 4, 16, 16
    x = jax.random.normal(key, (N, C, H, W), dtype=jnp.float32)

    y = jax.block_until_ready(random_pad_resize(x, seed=0))

    # Ground-truth check in float64 on host; tolerance reflects bf16 MXU operands.
    rs = np.random.RandomState(0)
    pads = tuple(int(v) for v in rs.randint(0, 8, size=4))
    a_mat, b_mat = _fold_pad_resize_matrices(H, W, pads)
    y_ref = _reference_f64(x, a_mat, b_mat)
    np.testing.assert_allclose(np.asarray(y, dtype=np.float64), y_ref,
                               rtol=5e-2, atol=5e-2)

    assert y.shape == (N, C, H, W)
    assert y.dtype == x.dtype
    print("KERNEL_OK")
</pallas_src>

<mosaic_0001>
module attributes {stable_mosaic.version = 11 : i64} {
  func.func @_kron_kernel(%arg0: i32, %arg1: i32, %arg2: memref<8x256xf32, #tpu.memory_space<vmem>>, %arg3: memref<256x256xbf16, #tpu.memory_space<vmem>>, %arg4: memref<8x256xf32, #tpu.memory_space<vmem>>) attributes {dimension_semantics = [#tpu.dimension_semantics<parallel>, #tpu.dimension_semantics<parallel>], iteration_bounds = array<i64: 1, 1>, scalar_prefetch = 0 : i64, scratch_operands = 0 : i64, tpu.core_type = #tpu.core_type<tc>, window_params = [{transform_indices = @transform_0, window_bounds = array<i64: 8, 256>}, {transform_indices = @transform_1, window_bounds = array<i64: 256, 256>}, {transform_indices = @transform_2, window_bounds = array<i64: 8, 256>}]} {
    %c0 = arith.constant 0 : index
    %c0_0 = arith.constant 0 : index
    %0 = vector.load %arg2[%c0, %c0_0] : memref<8x256xf32, #tpu.memory_space<vmem>>, vector<8x256xf32>
    %1 = arith.truncf %0 : vector<8x256xf32> to vector<8x256xbf16>
    %c0_1 = arith.constant 0 : index
    %c0_2 = arith.constant 0 : index
    %2 = vector.load %arg3[%c0_1, %c0_2] : memref<256x256xbf16, #tpu.memory_space<vmem>>, vector<256x256xbf16>
    %cst = arith.constant dense<0.000000e+00> : vector<8x256xf32>
    %3 = tpu.matmul %1, %2, %cst {dimension_numbers = #tpu.dot_dimension_numbers<[1], [0], [0], [1], [0, 0, 1, 1], [], []>} : vector<8x256xbf16>, vector<256x256xbf16>, vector<8x256xf32> -> vector<8x256xf32>
    %c0_3 = arith.constant 0 : index
    %c0_4 = arith.constant 0 : index
    %4 = vector.load %arg4[%c0_3, %c0_4] : memref<8x256xf32, #tpu.memory_space<vmem>>, vector<8x256xf32>
    tpu.vector_store %arg4[%c0_3, %c0_4], %3 {strides = array<i32>} : memref<8x256xf32, #tpu.memory_space<vmem>>, vector<8x256xf32>,
    return
  }
  func.func @transform_0(%arg0: i32, %arg1: i32) -> (i32, i32) {
    %c0_i32 = arith.constant 0 : i32
    %c0_i32_0 = arith.constant 0 : i32
    return %arg0, %c0_i32 : i32, i32
  }
  func.func @transform_1(%arg0: i32, %arg1: i32) -> (i32, i32) {
    %c0_i32 = arith.constant 0 : i32
    %c0_i32_0 = arith.constant 0 : i32
    return %c0_i32, %arg1 : i32, i32
  }
  func.func @transform_2(%arg0: i32, %arg1: i32) -> (i32, i32) {
    %c0_i32 = arith.constant 0 : i32
    return %arg0, %arg1 : i32, i32
  }
}

</mosaic_0001>

<llo_original>
// kernel: tpu_custom_call.1
$region0: #{tpu_custom_call.1}
  #allocation0 [shape = 'u32[]', space=smem, size = 0x4, offset = 0x4, fixed_abs, tag = 'smem constant byte address 0x4 - core index']
  #allocation1 [shape = 'u32[144,128]{1,0:T(1,128)}', space=vmem, size = 0x12000, scoped, tag = 'internal scratch']
  %s0 = inlined_call_operand.hbm [shape: f32[8,256], index: 0, kind: input, shape index: {}]
  %s1 = inlined_call_operand.hbm [shape: bf16[256,256], index: 1, kind: input, shape index: {}]
  %s2 = inlined_call_operand.hbm [shape: f32[8,256], index: 2, kind: output, shape index: {}]
  %s3 = sld [smem:[#allocation0]]
  $region26: #{tpu_custom_call.1} parent=0
    _
  %s5 = ssub.s32 1, %s3
  %s6 = scalar_select 0, %s5, %s3
  $region1: #{tpu_custom_call.1} parent=0
    #allocation2 [shape = 'u8[8192]{0}', space=vmem, size = 0x2000, scoped, tag = 'input window, operand 0, single buffered']
    #allocation3 [shape = 's32[1]{0}', space=sflag, size = 0x4, scoped, tag = 'scoped memory for tpu_custom_call.1']
    #allocation4 [shape = 's32[1]{0}', space=sflag, size = 0x4, scoped, tag = 'scoped memory for tpu_custom_call.1']
    #allocation5 [shape = 'u8[131072]{0}', space=vmem, size = 0x20000, scoped, tag = 'input window, operand 1, single buffered']
    #allocation6 [shape = 's32[1]{0}', space=sflag, size = 0x4, scoped, tag = 'scoped memory for tpu_custom_call.1']
    #allocation7 [shape = 'u8[8192]{0}', space=vmem, size = 0x2000, scoped, tag = 'output window, operand 0, single buffered']
    %7 = vsyncpa [#allocation3], 0
    %8 = vsyncpa [#allocation6], 0
    %9 = vsyncpa [#allocation4], 0
    // Predicated region
    $region2: #{tpu_custom_call.1} parent=1 // pred_check
      _
    $region3: #{tpu_custom_call.1} parent=1 // pred_check_branch
      %11 = sbr.rel (0) target = $region5
    $region4: #{tpu_custom_call.1} parent=1 // pred_region
      %s13 = ssub.s32 256, 256
      %14 = vsyncadd [#allocation3], %s13
      %s16 = sshll.u32 [#allocation2], 4
      %s17 = int_to_ptr.vmem [resolvable:$true] %s16
      %19 = dma.hbm_to_vmem [thread:$0]  %s0, 256, %s17, [#allocation3]
    $region5: #{tpu_custom_call.1} parent=1 // pred_fallthru
      _
    // Predicated region
    $region6: #{tpu_custom_call.1} parent=1 // pred_check
      _
    $region7: #{tpu_custom_call.1} parent=1 // pred_check_branch
      %21 = sbr.rel (0) target = $region9
    $region8: #{tpu_custom_call.1} parent=1 // pred_region
      %s23 = ssub.s32 4096, 4096
      %24 = vsyncadd [#allocation6], %s23
      %s25 = sshll.u32 [#allocation5], 4
      %s26 = int_to_ptr.vmem [resolvable:$true] %s25
      %31 = dma.hbm_to_vmem [thread:$0]  %s1, 4096, %s26, [#allocation6], 128, 128, 8
    $region9: #{tpu_custom_call.1} parent=1 // pred_fallthru
      _
    // Predicated region
    $region10: #{tpu_custom_call.1} parent=1 // pred_check
      _
    $region11: #{tpu_custom_call.1} parent=1 // pred_check_branch
      %33 = sbr.rel (0) target = $region13
    $region12: #{tpu_custom_call.1} parent=1 // pred_region
      %34 = dma.done [#allocation3], 256
    $region13: #{tpu_custom_call.1} parent=1 // pred_fallthru
      _
    // Predicated region
    $region14: #{tpu_custom_call.1} parent=1 // pred_check
      _
    $region15: #{tpu_custom_call.1} parent=1 // pred_check_branch
      %36 = sbr.rel (0) target = $region17
    $region16: #{tpu_custom_call.1} parent=1 // pred_region
      %37 = dma.done [#allocation6], 4096
    $region17: #{tpu_custom_call.1} parent=1 // pred_fallthru
      _
    %v38 = vld [vmem:[#allocation2] sm:$0xff]
    %v39 = vld [vmem:[#allocation2 + $0x8] sm:$0xff]
    %v40 = vpack.c.bf16 %v38, %v38
    %v41 = vpack.c.bf16 %v39, %v39
    %v42 = vld [vmem:[#allocation5] sm:$0xff]
    %v43 = vld [vmem:[#allocation5 + $0x8] sm:$0xff]
    %v44 = vld [vmem:[#allocation5 + $0x10] sm:$0xff]
    %v45 = vld [vmem:[#allocation5 + $0x18] sm:$0xff]
    %v46 = vld [vmem:[#allocation5 + $0x20] sm:$0xff]
    %v47 = vld [vmem:[#allocation5 + $0x28] sm:$0xff]
    %v48 = vld [vmem:[#allocation5 + $0x30] sm:$0xff]
    %v49 = vld [vmem:[#allocation5 + $0x38] sm:$0xff]
    %v50 = vld [vmem:[#allocation5 + $0x40] sm:$0xff]
    %v51 = vld [vmem:[#allocation5 + $0x48] sm:$0xff]
    %v52 = vld [vmem:[#allocation5 + $0x50] sm:$0xff]
    %v53 = vld [vmem:[#allocation5 + $0x58] sm:$0xff]
    %v54 = vld [vmem:[#allocation5 + $0x60] sm:$0xff]
    %v55 = vld [vmem:[#allocation5 + $0x68] sm:$0xff]
    %v56 = vld [vmem:[#allocation5 + $0x70] sm:$0xff]
    %v57 = vld [vmem:[#allocation5 + $0x78] sm:$0xff]
    %v58 = vld [vmem:[#allocation5 + $0x80] sm:$0xff]
    %v59 = vld [vmem:[#allocation5 + $0x88] sm:$0xff]
    %v60 = vld [vmem:[#allocation5 + $0x90] sm:$0xff]
    %v61 = vld [vmem:[#allocation5 + $0x98] sm:$0xff]
    %v62 = vld [vmem:[#allocation5 + $0xa0] sm:$0xff]
    %v63 = vld [vmem:[#allocation5 + $0xa8] sm:$0xff]
    %v64 = vld [vmem:[#allocation5 + $0xb0] sm:$0xff]
    %v65 = vld [vmem:[#allocation5 + $0xb8] sm:$0xff]
    %v66 = vld [vmem:[#allocation5 + $0xc0] sm:$0xff]
    %v67 = vld [vmem:[#allocation5 + $0xc8] sm:$0xff]
    %v68 = vld [vmem:[#allocation5 + $0xd0] sm:$0xff]
    %v69 = vld [vmem:[#allocation5 + $0xd8] sm:$0xff]
    %v70 = vld [vmem:[#allocation5 + $0xe0] sm:$0xff]
    %v71 = vld [vmem:[#allocation5 + $0xe8] sm:$0xff]
    %v72 = vld [vmem:[#allocation5 + $0xf0] sm:$0xff]
    %v73 = vld [vmem:[#allocation5 + $0xf8] sm:$0xff]
    %v106 = vunpack.c.l.b16 %v42
    %v107 = vunpack.c.h.b16 %v42
    %v108 = vunpack.c.l.b16 %v43
    %v109 = vunpack.c.h.b16 %v43
    %v110 = vunpack.c.l.b16 %v44
    %v111 = vunpack.c.h.b16 %v44
    %v112 = vunpack.c.l.b16 %v45
    %v113 = vunpack.c.h.b16 %v45
    %v114 = vunpack.c.l.b16 %v46
    %v115 = vunpack.c.h.b16 %v46
    %v116 = vunpack.c.l.b16 %v47
    %v117 = vunpack.c.h.b16 %v47
    %v118 = vunpack.c.l.b16 %v48
    %v119 = vunpack.c.h.b16 %v48
    %v120 = vunpack.c.l.b16 %v49
    %v121 = vunpack.c.h.b16 %v49
    %v122 = vunpack.c.l.b16 %v50
    %v123 = vunpack.c.h.b16 %v50
    %v124 = vunpack.c.l.b16 %v51
    %v125 = vunpack.c.h.b16 %v51
    %v126 = vunpack.c.l.b16 %v52
    %v127 = vunpack.c.h.b16 %v52
    %v128 = vunpack.c.l.b16 %v53
    %v129 = vunpack.c.h.b16 %v53
    %v130 = vunpack.c.l.b16 %v54
    %v131 = vunpack.c.h.b16 %v54
    %v132 = vunpack.c.l.b16 %v55
    %v133 = vunpack.c.h.b16 %v55
    %v134 = vunpack.c.l.b16 %v56
    %v135 = vunpack.c.h.b16 %v56
    %v136 = vunpack.c.l.b16 %v57
    %v137 = vunpack.c.h.b16 %v57
    %v138 = vunpack.c.l.b16 %v58
    %v139 = vunpack.c.h.b16 %v58
    %v140 = vunpack.c.l.b16 %v59
    %v141 = vunpack.c.h.b16 %v59
    %v142 = vunpack.c.l.b16 %v60
    %v143 = vunpack.c.h.b16 %v60
    %v144 = vunpack.c.l.b16 %v61
    %v145 = vunpack.c.h.b16 %v61
    %v146 = vunpack.c.l.b16 %v62
    %v147 = vunpack.c.h.b16 %v62
    %v148 = vunpack.c.l.b16 %v63
    %v149 = vunpack.c.h.b16 %v63
    %v150 = vunpack.c.l.b16 %v64
    %v151 = vunpack.c.h.b16 %v64
    %v152 = vunpack.c.l.b16 %v65
    %v153 = vunpack.c.h.b16 %v65
    %v154 = vunpack.c.l.b16 %v66
    %v155 = vunpack.c.h.b16 %v66
    %v156 = vunpack.c.l.b16 %v67
    %v157 = vunpack.c.h.b16 %v67
    %v158 = vunpack.c.l.b16 %v68
    %v159 = vunpack.c.h.b16 %v68
    %v160 = vunpack.c.l.b16 %v69
    %v161 = vunpack.c.h.b16 %v69
    %v162 = vunpack.c.l.b16 %v70
    %v163 = vunpack.c.h.b16 %v70
    %v164 = vunpack.c.l.b16 %v71
    %v165 = vunpack.c.h.b16 %v71
    %v166 = vunpack.c.l.b16 %v72
    %v167 = vunpack.c.h.b16 %v72
    %v168 = vunpack.c.l.b16 %v73
    %v169 = vunpack.c.h.b16 %v73
    %v170 = vpack.c.b16 %v108, %v106
    %v171 = vpack.c.b16 %v109, %v107
    %v172 = vpack.c.b16 %v112, %v110
    %v173 = vpack.c.b16 %v113, %v111
    %v174 = vpack.c.b16 %v116, %v114
    %v175 = vpack.c.b16 %v117, %v115
    %v176 = vpack.c.b16 %v120, %v118
    %v177 = vpack.c.b16 %v121, %v119
    %v178 = vpack.c.b16 %v124, %v122
    %v179 = vpack.c.b16 %v125, %v123
    %v180 = vpack.c.b16 %v128, %v126
    %v181 = vpack.c.b16 %v129, %v127
    %v182 = vpack.c.b16 %v132, %v130
    %v183 = vpack.c.b16 %v133, %v131
    %v184 = vpack.c.b16 %v136, %v134
    %v185 = vpack.c.b16 %v137, %v135
    %v186 = vpack.c.b16 %v140, %v138
    %v187 = vpack.c.b16 %v141, %v139
    %v188 = vpack.c.b16 %v144, %v142
    %v189 = vpack.c.b16 %v145, %v143
    %v190 = vpack.c.b16 %v148, %v146
    %v191 = vpack.c.b16 %v149, %v147
    %v192 = vpack.c.b16 %v152, %v150
    %v193 = vpack.c.b16 %v153, %v151
    %v194 = vpack.c.b16 %v156, %v154
    %v195 = vpack.c.b16 %v157, %v155
    %v196 = vpack.c.b16 %v160, %v158
    %v197 = vpack.c.b16 %v161, %v159
    %v198 = vpack.c.b16 %v164, %v162
    %v199 = vpack.c.b16 %v165, %v163
    %v200 = vpack.c.b16 %v168, %v166
    %v201 = vpack.c.b16 %v169, %v167
    %234 = vmatprep.subr.bf16.mxu0 %v171
    %235 = vmatpush1.bf16.msra.mxu0 %v170
    %236 = vmatprep.subr.bf16.mxu0 %v173
    %237 = vmatpush1.bf16.msra.mxu0 %v172
    %238 = vmatprep.subr.bf16.mxu0 %v175
    %239 = vmatpush1.bf16.msra.mxu0 %v174
    %240 = vmatprep.subr.bf16.mxu0 %v177
    %241 = vmatpush1.bf16.msra.mxu0 %v176
    %242 = vmatprep.subr.bf16.mxu0 %v179
    %243 = vmatpush1.bf16.msra.mxu0 %v178
    %244 = vmatprep.subr.bf16.mxu0 %v181
    %245 = vmatpush1.bf16.msra.mxu0 %v180
    %246 = vmatprep.subr.bf16.mxu0 %v183
    %247 = vmatpush1.bf16.msra.mxu0 %v182
    %248 = vmatprep.subr.bf16.mxu0 %v185
    %249 = vmatpush1.bf16.msra.mxu0 %v184
    %250 = vmatprep.subr.bf16.mxu0 %v187
    %251 = vmatpush1.bf16.msra.mxu0 %v186
    %252 = vmatprep.subr.bf16.mxu0 %v189
    %253 = vmatpush1.bf16.msra.mxu0 %v188
    %254 = vmatprep.subr.bf16.mxu0 %v191
    %255 = vmatpush1.bf16.msra.mxu0 %v190
    %256 = vmatprep.subr.bf16.mxu0 %v193
    %257 = vmatpush1.bf16.msra.mxu0 %v192
    %258 = vmatprep.subr.bf16.mxu0 %v195
    %259 = vmatpush1.bf16.msra.mxu0 %v194
    %260 = vmatprep.subr.bf16.mxu0 %v197
    %261 = vmatpush1.bf16.msra.mxu0 %v196
    %262 = vmatprep.subr.bf16.mxu0 %v199
    %263 = vmatpush1.bf16.msra.mxu0 %v198
    %264 = vmatprep.subr.bf16.mxu0 %v201
    %265 = vmatpush1.bf16.msra.mxu0 %v200
    %266 = vmatprep.mubr.bf16.mxu0 %v41
    %267 = vmatmul.mubr.bf16.gmra.mrb[0].mxu0 %v40
    %v268 = vpop.f32.mrb[0].mxu0
    %v269 = vadd.f32 0.0, %v268
    %v270 = vpop.f32.mrb[0].mxu0
    %v271 = vadd.f32 0.0, %v270
    %v272 = vpop.f32.mrb[0].mxu0
    %v273 = vpop.f32.mrb[0].mxu0
    %274 = vdwg.mxu0
    %275 = vst [vmem:[#allocation7] sm:$0xff] %v269
    %276 = vst [vmem:[#allocation7 + $0x8] sm:$0xff] %v271
    // Predicated region
    $region18: #{tpu_custom_call.1} parent=1 // pred_check
      _
    $region19: #{tpu_custom_call.1} parent=1 // pred_check_branch
      %278 = sbr.rel (0) target = $region21
    $region20: #{tpu_custom_call.1} parent=1 // pred_region
      %s280 = ssub.s32 256, 256
      %281 = vsyncadd [#allocation4], %s280
      %s283 = sshll.u32 [#allocation7], 4
      %s284 = int_to_ptr.vmem [resolvable:$true] %s283
      %286 = dma.vmem_to_hbm [thread:$0]  %s284, 256, %s2, [#allocation4]
    $region21: #{tpu_custom_call.1} parent=1 // pred_fallthru
      _
    // Predicated region
    $region22: #{tpu_custom_call.1} parent=1 // pred_check
      _
    $region23: #{tpu_custom_call.1} parent=1 // pred_check_branch
      %288 = sbr.rel (0) target = $region25
    $region24: #{tpu_custom_call.1} parent=1 // pred_region
      %289 = dma.done [#allocation4], 256
    $region25: #{tpu_custom_call.1} parent=1 // pred_fallthru
      _
    %290 = vsyncpa [#allocation3], 1
    %291 = vsyncpa [#allocation6], 1
    %292 = vsyncpa [#allocation4], 1

</llo_original>
